<compile_context>
chip_gen: v6e
topology: v6e:2x2x1
jax: 0.10.0
libtpu: 0.0.40
codegen_flags: <defaults>
</compile_context>

<pallas_src>
import functools

import jax
import jax.numpy as jnp
from jax.experimental import pallas as pl
from jax.experimental.pallas import tpu as pltpu


def _round_up(x, m):
    return ((x + m - 1) // m) * m


def _divisor_tile(total, target, step=128):
    """Largest multiple of `step` that divides `total` and is <= target."""
    if total % step != 0:
        return total  # full extent (always a valid BlockSpec block)
    t = max(step, (min(target, total) // step) * step)
    while total % t != 0:
        t -= step
    return t


# ------------------------------------------------------------------ kernels --

def _ffn_kernel_acc(x_ref, w1_ref, b1_ref, w2_ref, b2_ref, o_ref, acc_ref, *,
                    approximate_gelu):
    # x_ref: (tm, dim)  w1_ref: (dim, th)  b1_ref: (1, th)
    # w2_ref: (th, dim) b2_ref: (1, dim)   o_ref: (tm, dim)
    # acc_ref: (tm, dim) f32 VMEM scratch (used when output dtype != f32).
    j = pl.program_id(1)

    @pl.when(j == 0)
    def _():
        acc_ref[...] = jnp.zeros_like(acc_ref)

    h = jnp.dot(x_ref[...], w1_ref[...], preferred_element_type=jnp.float32)
    h = h + b1_ref[...].astype(jnp.float32)
    h = jax.nn.gelu(h, approximate=approximate_gelu)
    acc_ref[...] += jnp.dot(h.astype(w2_ref.dtype), w2_ref[...],
                            preferred_element_type=jnp.float32)

    @pl.when(j == pl.num_programs(1) - 1)
    def _():
        o_ref[...] = (acc_ref[...] + b2_ref[...].astype(jnp.float32)).astype(o_ref.dtype)


def _ffn_kernel_noacc(x_ref, w1_ref, b1_ref, w2_ref, b2_ref, o_ref, *,
                      approximate_gelu):
    # f32 output: accumulate directly into the VMEM-resident output block
    # (its block index is constant along the hidden/j axis) -> no scratch.
    j = pl.program_id(1)

    @pl.when(j == 0)
    def _():
        o_ref[...] = jnp.zeros_like(o_ref)

    h = jnp.dot(x_ref[...], w1_ref[...], preferred_element_type=jnp.float32)
    h = h + b1_ref[...].astype(jnp.float32)
    h = jax.nn.gelu(h, approximate=approximate_gelu)
    o_ref[...] += jnp.dot(h.astype(w2_ref.dtype), w2_ref[...],
                          preferred_element_type=jnp.float32)

    @pl.when(j == pl.num_programs(1) - 1)
    def _():
        o_ref[...] = o_ref[...] + b2_ref[...].astype(o_ref.dtype)


# ------------------------------------------------------------ tile selection --

def _chip_defaults():
    """(tm, th, vmem_limit_bytes) defaults per TPU generation."""
    kind = ""
    try:
        kind = jax.devices()[0].device_kind.lower()
    except Exception:
        pass
    try:
        vmem_cap = int(pltpu.get_tpu_info().vmem_capacity_bytes)
    except Exception:
        vmem_cap = 64 * 1024 * 1024  # conservative (v7x-sized) fallback
    if "v6" in kind:
        tm, th = 1024, 1024          # bf16 MXU roofline needs tm >~ 700 on v6e
    elif "v5" in kind:
        tm, th = 512, 1024           # 128 MiB VMEM; crossover ~ tm 240
    else:                            # v7x or unknown: 64 MiB VMEM is binding
        tm, th = 512, 512
    vmem_limit = int(min(vmem_cap * 7 // 8, 112 * 1024 * 1024))
    return tm, th, vmem_limit


def _shrink_to_fit(tm, th, dim, hidden_pad, w_bytes, x_bytes, o_bytes, limit,
                   use_acc):
    """Reduce th, then tm, until the double-buffered working set fits VMEM."""
    def bytes_needed(tm_, th_):
        weights = 2 * (dim * th_ + th_ * dim) * w_bytes        # W1+W2, 2-buffered
        acts = 2 * tm_ * dim * x_bytes + 2 * tm_ * dim * o_bytes
        acc = tm_ * dim * 4 if use_acc else 0
        biases = 2 * (hidden_pad + dim) * 4
        return weights + acts + acc + biases

    budget = int(limit * 0.85)
    while bytes_needed(tm, th) > budget and th > 128:
        th = _divisor_tile(hidden_pad, th - 128)
    while bytes_needed(tm, th) > budget and tm > 128:
        tm -= 128
    return tm, th


# ------------------------------------------------------------------ wrappers --

@functools.partial(jax.jit,
                   static_argnames=("tm", "th", "approximate_gelu", "vmem_limit"))
def _feed_forward_impl(x, w1, b1, w2, b2, *, tm, th, approximate_gelu, vmem_limit):
    orig_shape = x.shape
    dim = orig_shape[-1]
    hidden_pad = w1.shape[1]
    assert hidden_pad == w2.shape[0] and hidden_pad % th == 0

    xm = x.reshape(-1, dim).astype(w1.dtype)   # activations -> compute dtype
    M = xm.shape[0]
    M_pad = _round_up(M, tm)
    if M_pad != M:
        xm = jnp.pad(xm, ((0, M_pad - M), (0, 0)))

    b1_2d = b1.reshape(1, hidden_pad).astype(jnp.float32)
    b2_2d = b2.reshape(1, dim).astype(jnp.float32)

    out_dtype = x.dtype
    use_acc = out_dtype != jnp.float32
    kernel = functools.partial(
        _ffn_kernel_acc if use_acc else _ffn_kernel_noacc,
        approximate_gelu=approximate_gelu)
    scratch = [pltpu.VMEM((tm, dim), jnp.float32)] if use_acc else []

    grid = (M_pad // tm, hidden_pad // th)

    out = pl.pallas_call(
        kernel,
        out_shape=jax.ShapeDtypeStruct((M_pad, dim), out_dtype),
        grid_spec=pltpu.PrefetchScalarGridSpec(
            num_scalar_prefetch=0,
            grid=grid,
            in_specs=[
                pl.BlockSpec((tm, dim), lambda i, j: (i, 0)),   # x row tile
                pl.BlockSpec((dim, th), lambda i, j: (0, j)),   # W1 column block
                pl.BlockSpec((1, th), lambda i, j: (0, j)),     # b1 block
                pl.BlockSpec((th, dim), lambda i, j: (j, 0)),   # W2 row block
                pl.BlockSpec((1, dim), lambda i, j: (0, 0)),    # b2 (finalize)
            ],
            out_specs=pl.BlockSpec((tm, dim), lambda i, j: (i, 0)),
            scratch_shapes=scratch,
        ),
        compiler_params=pltpu.CompilerParams(
            dimension_semantics=("parallel", "arbitrary"),
            vmem_limit_bytes=vmem_limit,
        ),
    )(xm, w1, b1_2d, w2, b2_2d)

    if M_pad != M:
        out = out[:M]
    return out.reshape(orig_shape)


def feed_forward(x, w1, b1, w2, b2, *, tm=None, th=None, approximate_gelu=True):
    """x: (..., dim) -> (..., dim). Expects weights from prepare_params()
    (hidden dim pre-padded to a multiple of 128, compute dtype e.g. bf16)."""
    dim = x.shape[-1]
    hidden_pad = w1.shape[1]
    M = 1
    for s in x.shape[:-1]:
        M *= s

    tm_def, th_def, vmem_limit = _chip_defaults()
    tm = tm_def if tm is None else tm
    th = th_def if th is None else th

    # Row tile: MXU-native multiple of 128, clamped to the (padded) row count.
    tm = min(_round_up(tm, 128), _round_up(M, 128))
    # Hidden tile: multiple of 128 that divides the pre-padded hidden dim.
    th = _divisor_tile(hidden_pad, th)

    w_bytes = jnp.dtype(w1.dtype).itemsize
    o_bytes = jnp.dtype(x.dtype).itemsize
    use_acc = x.dtype != jnp.float32
    tm, th = _shrink_to_fit(tm, th, dim, hidden_pad, w_bytes, w_bytes, o_bytes,
                            vmem_limit, use_acc)
    th = _divisor_tile(hidden_pad, th)

    # NOTE(v7x): with very large tm make sure M_pad // tm >= 2 so the parallel
    # row axis still splits across the two TensorCores.
    return _feed_forward_impl(x, w1, b1, w2, b2, tm=tm, th=th,
                              approximate_gelu=approximate_gelu,
                              vmem_limit=vmem_limit)


def prepare_params(w1, b1, w2, b2, compute_dtype=jnp.bfloat16):
    """One-time weight prep OUTSIDE the jitted forward: pad the hidden dim to a
    multiple of 128 and cast the matmul operands to the MXU compute dtype.
    Zero-padded hidden units contribute gelu(0 + 0) @ 0 == 0."""
    hidden = w1.shape[1]
    hidden_pad = _round_up(hidden, 128)
    if hidden_pad != hidden:
        w1 = jnp.pad(w1, ((0, 0), (0, hidden_pad - hidden)))
        b1 = jnp.pad(b1, ((0, hidden_pad - hidden),))
        w2 = jnp.pad(w2, ((0, hidden_pad - hidden), (0, 0)))
    return (w1.astype(compute_dtype), b1.astype(jnp.float32),
            w2.astype(compute_dtype), b2.astype(jnp.float32))


def init_params(key, dim, hidden_dim, dtype=jnp.float32):
    """Deterministic init mimicking torch.nn.Linear (uniform +/- 1/sqrt(fan_in));
    weights stored as (in_features, out_features)."""
    k1, k2, k3, k4 = jax.random.split(key, 4)
    lim1 = 1.0 / jnp.sqrt(dim)
    lim2 = 1.0 / jnp.sqrt(hidden_dim)
    w1 = jax.random.uniform(k1, (dim, hidden_dim), dtype, -lim1, lim1)
    b1 = jax.random.uniform(k2, (hidden_dim,), dtype, -lim1, lim1)
    w2 = jax.random.uniform(k3, (hidden_dim, dim), dtype, -lim2, lim2)
    b2 = jax.random.uniform(k4, (dim,), dtype, -lim2, lim2)
    return w1, b1, w2, b2


if __name__ == "__main__":
    # Small but lane-dense shapes (dim multiple of 128 keeps stores unmasked).
    batch, seq, dim, hidden_dim = 2, 8, 128, 256
    key = jax.random.PRNGKey(0)
    kx, kp = jax.random.split(key)

    x = jax.random.normal(kx, (batch, seq, dim), dtype=jnp.float32)
    w1, b1, w2, b2 = init_params(kp, dim, hidden_dim, dtype=jnp.float32)

    # One-time cast of f32 master weights to bf16 for the MXU (outside jit).
    w1c, b1c, w2c, b2c = prepare_params(w1, b1, w2, b2, compute_dtype=jnp.bfloat16)

    y = feed_forward(x, w1c, b1c, w2c, b2c)
    y = jax.block_until_ready(y)

    # Reference: plain JAX, f32, erf-GELU (matches torch nn.GELU() default).
    x2d = x.reshape(-1, dim)
    h_ref = jax.nn.gelu(
        jnp.dot(x2d, w1, precision=jax.lax.Precision.HIGHEST) + b1,
        approximate=False)
    y_ref = (jnp.dot(h_ref, w2, precision=jax.lax.Precision.HIGHEST) + b2)
    y_ref = y_ref.reshape(x.shape)

    assert y.shape == x.shape and y.dtype == x.dtype
    err = float(jnp.max(jnp.abs(y.astype(jnp.float32) - y_ref)))
    # bf16 matmul operands + tanh-GELU vs. the all-f32 erf reference -> loose tol.
    assert err < 3e-2, err

    print("KERNEL_OK")
</pallas_src>

<mosaic_0001>
module attributes {stable_mosaic.version = 11 : i64} {
  func.func @_ffn_kernel_noacc(%arg0: i32, %arg1: i32, %arg2: memref<128x128xbf16, #tpu.memory_space<vmem>>, %arg3: memref<128x256xbf16, #tpu.memory_space<vmem>>, %arg4: memref<1x256xf32, #tpu.memory_space<vmem>>, %arg5: memref<256x128xbf16, #tpu.memory_space<vmem>>, %arg6: memref<1x128xf32, #tpu.memory_space<vmem>>, %arg7: memref<128x128xf32, #tpu.memory_space<vmem>>) attributes {dimension_semantics = [#tpu.dimension_semantics<parallel>, #tpu.dimension_semantics<arbitrary>], iteration_bounds = array<i64: 1, 1>, scalar_prefetch = 0 : i64, scratch_operands = 0 : i64, tpu.core_type = #tpu.core_type<tc>, window_params = [{transform_indices = @transform_0, window_bounds = array<i64: 128, 128>}, {transform_indices = @transform_1, window_bounds = array<i64: 128, 256>}, {transform_indices = @transform_2, window_bounds = array<i64: 1, 256>}, {transform_indices = @transform_3, window_bounds = array<i64: 256, 128>}, {pipeline_mode = #tpu.pipeline_mode<synchronous>, transform_indices = @transform_4, window_bounds = array<i64: 1, 128>}, {transform_indices = @transform_5, window_bounds = array<i64: 128, 128>}]} {
    %c0_i32 = arith.constant 0 : i32
    %0 = arith.cmpi eq, %arg1, %c0_i32 : i32
    %1 = arith.extui %0 : i1 to i32
    %c0_i32_0 = arith.constant 0 : i32
    %2 = arith.cmpi ne, %1, %c0_i32_0 : i32
    scf.if %2 {
      %cst_19 = arith.constant 0.000000e+00 : f32
      %31 = vector.broadcast %cst_19 : f32 to vector<128x128xf32>
      %c0_20 = arith.constant 0 : index
      %c0_21 = arith.constant 0 : index
      %32 = vector.load %arg7[%c0_20, %c0_21] : memref<128x128xf32, #tpu.memory_space<vmem>>, vector<128x128xf32>
      tpu.vector_store %arg7[%c0_20, %c0_21], %31 {strides = array<i32>} : memref<128x128xf32, #tpu.memory_space<vmem>>, vector<128x128xf32>,
    } else {
    }
    %c0 = arith.constant 0 : index
    %c0_1 = arith.constant 0 : index
    %3 = vector.load %arg2[%c0, %c0_1] : memref<128x128xbf16, #tpu.memory_space<vmem>>, vector<128x128xbf16>
    %c0_2 = arith.constant 0 : index
    %c0_3 = arith.constant 0 : index
    %4 = vector.load %arg3[%c0_2, %c0_3] : memref<128x256xbf16, #tpu.memory_space<vmem>>, vector<128x256xbf16>
    %cst = arith.constant dense<0.000000e+00> : vector<128x256xf32>
    %5 = tpu.matmul %3, %4, %cst {dimension_numbers = #tpu.dot_dimension_numbers<[1], [0], [0], [1], [0, 0, 1, 1], [], []>} : vector<128x128xbf16>, vector<128x256xbf16>, vector<128x256xf32> -> vector<128x256xf32>
    %c0_4 = arith.constant 0 : index
    %c0_5 = arith.constant 0 : index
    %6 = vector.load %arg4[%c0_4, %c0_5] : memref<1x256xf32, #tpu.memory_space<vmem>>, vector<1x256xf32>
    %7 = vector.broadcast %6 : vector<1x256xf32> to vector<128x256xf32>
    %8 = arith.addf %5, %7 : vector<128x256xf32>
    %9 = arith.mulf %8, %8 : vector<128x256xf32>
    %10 = arith.mulf %8, %9 : vector<128x256xf32>
    %cst_6 = arith.constant 4.471500e-02 : f32
    %11 = vector.broadcast %cst_6 : f32 to vector<128x256xf32>
    %12 = arith.mulf %11, %10 : vector<128x256xf32>
    %13 = arith.addf %8, %12 : vector<128x256xf32>
    %cst_7 = arith.constant 0.797884583 : f32
    %14 = vector.broadcast %cst_7 : f32 to vector<128x256xf32>
    %15 = arith.mulf %14, %13 : vector<128x256xf32>
    %16 = math.tanh %15 : vector<128x256xf32>
    %cst_8 = arith.constant 1.000000e+00 : f32
    %17 = vector.broadcast %cst_8 : f32 to vector<128x256xf32>
    %18 = arith.addf %17, %16 : vector<128x256xf32>
    %cst_9 = arith.constant 5.000000e-01 : f32
    %19 = vector.broadcast %cst_9 : f32 to vector<128x256xf32>
    %20 = arith.mulf %19, %18 : vector<128x256xf32>
    %21 = arith.mulf %8, %20 : vector<128x256xf32>
    %c0_10 = arith.constant 0 : index
    %c0_11 = arith.constant 0 : index
    %22 = vector.load %arg7[%c0_10, %c0_11] : memref<128x128xf32, #tpu.memory_space<vmem>>, vector<128x128xf32>
    %23 = arith.truncf %21 : vector<128x256xf32> to vector<128x256xbf16>
    %c0_12 = arith.constant 0 : index
    %c0_13 = arith.constant 0 : index
    %24 = vector.load %arg5[%c0_12, %c0_13] : memref<256x128xbf16, #tpu.memory_space<vmem>>, vector<256x128xbf16>
    %cst_14 = arith.constant dense<0.000000e+00> : vector<128x128xf32>
    %25 = tpu.matmul %23, %24, %cst_14 {dimension_numbers = #tpu.dot_dimension_numbers<[1], [0], [0], [1], [0, 0, 1, 1], [], []>} : vector<128x256xbf16>, vector<256x128xbf16>, vector<128x128xf32> -> vector<128x128xf32>
    %26 = arith.addf %22, %25 : vector<128x128xf32>
    %c0_15 = arith.constant 0 : index
    %c0_16 = arith.constant 0 : index
    %27 = vector.load %arg7[%c0_15, %c0_16] : memref<128x128xf32, #tpu.memory_space<vmem>>, vector<128x128xf32>
    tpu.vector_store %arg7[%c0_15, %c0_16], %26 {strides = array<i32>} : memref<128x128xf32, #tpu.memory_space<vmem>>, vector<128x128xf32>,
    %c0_i32_17 = arith.constant 0 : i32
    %28 = arith.cmpi eq, %arg1, %c0_i32_17 : i32
    %29 = arith.extui %28 : i1 to i32
    %c0_i32_18 = arith.constant 0 : i32
    %30 = arith.cmpi ne, %29, %c0_i32_18 : i32
    scf.if %30 {
      %c0_19 = arith.constant 0 : index
      %c0_20 = arith.constant 0 : index
      %31 = vector.load %arg7[%c0_19, %c0_20] : memref<128x128xf32, #tpu.memory_space<vmem>>, vector<128x128xf32>
      %c0_21 = arith.constant 0 : index
      %c0_22 = arith.constant 0 : index
      %32 = vector.load %arg6[%c0_21, %c0_22] : memref<1x128xf32, #tpu.memory_space<vmem>>, vector<1x128xf32>
      %33 = vector.broadcast %32 : vector<1x128xf32> to vector<128x128xf32>
      %34 = arith.addf %31, %33 : vector<128x128xf32>
      %c0_23 = arith.constant 0 : index
      %c0_24 = arith.constant 0 : index
      %35 = vector.load %arg7[%c0_23, %c0_24] : memref<128x128xf32, #tpu.memory_space<vmem>>, vector<128x128xf32>
      tpu.vector_store %arg7[%c0_23, %c0_24], %34 {strides = array<i32>} : memref<128x128xf32, #tpu.memory_space<vmem>>, vector<128x128xf32>,
    } else {
    }
    return
  }
  func.func @transform_0(%arg0: i32, %arg1: i32) -> (i32, i32) {
    %c0_i32 = arith.constant 0 : i32
    %c0_i32_0 = arith.constant 0 : i32
    return %arg0, %c0_i32 : i32, i32
  }
  func.func @transform_1(%arg0: i32, %arg1: i32) -> (i32, i32) {
    %c0_i32 = arith.constant 0 : i32
    %c0_i32_0 = arith.constant 0 : i32
    return %c0_i32, %arg1 : i32, i32
  }
  func.func @transform_2(%arg0: i32, %arg1: i32) -> (i32, i32) {
    %c0_i32 = arith.constant 0 : i32
    %c0_i32_0 = arith.constant 0 : i32
    return %c0_i32, %arg1 : i32, i32
  }
  func.func @transform_3(%arg0: i32, %arg1: i32) -> (i32, i32) {
    %c0_i32 = arith.constant 0 : i32
    %c0_i32_0 = arith.constant 0 : i32
    return %arg1, %c0_i32 : i32, i32
  }
  func.func @transform_4(%arg0: i32, %arg1: i32) -> (i32, i32) {
    %c0_i32 = arith.constant 0 : i32
    %c0_i32_0 = arith.constant 0 : i32
    %c0_i32_1 = arith.constant 0 : i32
    return %c0_i32, %c0_i32_0 : i32, i32
  }
  func.func @transform_5(%arg0: i32, %arg1: i32) -> (i32, i32) {
    %c0_i32 = arith.constant 0 : i32
    %c0_i32_0 = arith.constant 0 : i32
    return %arg0, %c0_i32 : i32, i32
  }
}

</mosaic_0001>

<llo_original>
// kernel: _feed_forward_impl.1
$region0: #{_feed_forward_impl.1}
  #allocation0 [shape = 'u32[]', space=smem, size = 0x4, offset = 0x4, fixed_abs, tag = 'smem constant byte address 0x4 - core index']
  #allocation1 [shape = 'u32[144,128]{1,0:T(1,128)}', space=vmem, size = 0x12000, scoped, tag = 'internal scratch']
  %s0 = inlined_call_operand.vmem [shape: bf16[128,128], index: 0, kind: input, shape index: {}]
  %s1 = inlined_call_operand.hbm [shape: bf16[128,256], index: 1, kind: input, shape index: {}]
  %s2 = inlined_call_operand.vmem [shape: f32[1,256], index: 2, kind: input, shape index: {}]
  %s3 = inlined_call_operand.hbm [shape: bf16[256,128], index: 3, kind: input, shape index: {}]
  %s4 = inlined_call_operand.vmem [shape: f32[1,128], index: 4, kind: input, shape index: {}]
  %s5 = inlined_call_operand.vmem [shape: f32[128,128], index: 5, kind: output, shape index: {}]
  %s6 = sld [smem:[#allocation0]]
  $region46: #{_feed_forward_impl.1} parent=0
    _
  %s8 = ssub.s32 1, %s6
  %s9 = scalar_select 0, %s8, %s6
  $region1: #{_feed_forward_impl.1} parent=0
    #allocation2 [shape = 'u8[65536]{0}', space=vmem, size = 0x10000, scoped, tag = 'input window, operand 1, single buffered']
    #allocation3 [shape = 's32[1]{0}', space=sflag, size = 0x4, scoped, tag = 'scoped memory for _feed_forward_impl.1']
    #allocation4 [shape = 'u8[65536]{0}', space=vmem, size = 0x10000, scoped, tag = 'input window, operand 3, single buffered']
    #allocation5 [shape = 's32[1]{0}', space=sflag, size = 0x4, scoped, tag = 'scoped memory for _feed_forward_impl.1']
    %10 = vsyncpa [#allocation3], 0
    %11 = vsyncpa [#allocation5], 0
    // Predicated region
    $region2: #{_feed_forward_impl.1} parent=1 // pred_check
      _
    $region3: #{_feed_forward_impl.1} parent=1 // pred_check_branch
      %13 = sbr.rel (0) target = $region5
    $region4: #{_feed_forward_impl.1} parent=1 // pred_region
      _
    $region5: #{_feed_forward_impl.1} parent=1 // pred_fallthru
      _
    // Predicated region
    $region6: #{_feed_forward_impl.1} parent=1 // pred_check
      _
    $region7: #{_feed_forward_impl.1} parent=1 // pred_check_branch
      %15 = sbr.rel (0) target = $region9
    $region8: #{_feed_forward_impl.1} parent=1 // pred_region
      %s17 = ssub.s32 2048, 2048
      %18 = vsyncadd [#allocation3], %s17
      %s19 = sshll.u32 [#allocation2], 4
      %s20 = int_to_ptr.vmem [resolvable:$true] %s19
      %25 = dma.hbm_to_vmem [thread:$0]  %s1, 2048, %s20, [#allocation3], 128, 128, 8
    $region9: #{_feed_forward_impl.1} parent=1 // pred_fallthru
      _
    // Predicated region
    $region10: #{_feed_forward_impl.1} parent=1 // pred_check
      _
    $region11: #{_feed_forward_impl.1} parent=1 // pred_check_branch
      %27 = sbr.rel (0) target = $region13
    $region12: #{_feed_forward_impl.1} parent=1 // pred_region
      _
    $region13: #{_feed_forward_impl.1} parent=1 // pred_fallthru
      _
    // Predicated region
    $region14: #{_feed_forward_impl.1} parent=1 // pred_check
      _
    $region15: #{_feed_forward_impl.1} parent=1 // pred_check_branch
      %29 = sbr.rel (0) target = $region17
    $region16: #{_feed_forward_impl.1} parent=1 // pred_region
      %s31 = ssub.s32 2048, 2048
      %32 = vsyncadd [#allocation5], %s31
      %s33 = sshll.u32 [#allocation4], 4
      %s34 = int_to_ptr.vmem [resolvable:$true] %s33
      %39 = dma.hbm_to_vmem [thread:$0]  %s3, 2048, %s34, [#allocation5], 64, 64, 4
    $region17: #{_feed_forward_impl.1} parent=1 // pred_fallthru
      _
    // Predicated region
    $region18: #{_feed_forward_impl.1} parent=1 // pred_check
      _
    $region19: #{_feed_forward_impl.1} parent=1 // pred_check_branch
      %41 = sbr.rel (0) target = $region21
    $region20: #{_feed_forward_impl.1} parent=1 // pred_region
      _
    $region21: #{_feed_forward_impl.1} parent=1 // pred_fallthru
      _
    // Predicated region
    $region22: #{_feed_forward_impl.1} parent=1 // pred_check
      _
    $region23: #{_feed_forward_impl.1} parent=1 // pred_check_branch
      %43 = sbr.rel (0) target = $region25
    $region24: #{_feed_forward_impl.1} parent=1 // pred_region
      %44 = dma.done [#allocation3], 2048
    $region25: #{_feed_forward_impl.1} parent=1 // pred_fallthru
      _
    // Predicated region
    $region26: #{_feed_forward_impl.1} parent=1 // pred_check
      _
    $region27: #{_feed_forward_impl.1} parent=1 // pred_check_branch
      %46 = sbr.rel (0) target = $region29
    $region28: #{_feed_forward_impl.1} parent=1 // pred_region
      %47 = dma.done [#allocation5], 2048
    $region29: #{_feed_forward_impl.1} parent=1 // pred_fallthru
      _
    %p49 = scmp.eq.s32.totalorder 0, 0
    // Predicated region
    $region30: #{_feed_forward_impl.1} parent=1 // pred_check
      %p50 = pneg %p49
    $region31: #{_feed_forward_impl.1} parent=1 // pred_check_branch
      %52 = sbr.rel (%p50) target = $region33
    $region32: #{_feed_forward_impl.1} parent=1 // pred_region
      %53 = vst [vmem:[%s5] sm:$0xff] 0.0
      %54 = vst [vmem:[%s5 + $0x8] sm:$0xff] 0.0
      %55 = vst [vmem:[%s5 + $0x10] sm:$0xff] 0.0
      %56 = vst [vmem:[%s5 + $0x18] sm:$0xff] 0.0
      %57 = vst [vmem:[%s5 + $0x20] sm:$0xff] 0.0
      %58 = vst [vmem:[%s5 + $0x28] sm:$0xff] 0.0
      %59 = vst [vmem:[%s5 + $0x30] sm:$0xff] 0.0
      %60 = vst [vmem:[%s5 + $0x38] sm:$0xff] 0.0
      %61 = vst [vmem:[%s5 + $0x40] sm:$0xff] 0.0
      %62 = vst [vmem:[%s5 + $0x48] sm:$0xff] 0.0
      %63 = vst [vmem:[%s5 + $0x50] sm:$0xff] 0.0
      %64 = vst [vmem:[%s5 + $0x58] sm:$0xff] 0.0
      %65 = vst [vmem:[%s5 + $0x60] sm:$0xff] 0.0
      %66 = vst [vmem:[%s5 + $0x68] sm:$0xff] 0.0
      %67 = vst [vmem:[%s5 + $0x70] sm:$0xff] 0.0
      %68 = vst [vmem:[%s5 + $0x78] sm:$0xff] 0.0
    $region33: #{_feed_forward_impl.1} parent=1 // pred_fallthru
      _
    %v69 = vld [vmem:[%s0] sm:$0xf]
    %v70 = vld [vmem:[%s0 + $0x4] sm:$0xf]
    %v71 = vld [vmem:[%s0 + $0x8] sm:$0xf]
    %v72 = vld [vmem:[%s0 + $0xc] sm:$0xf]
    %v73 = vld [vmem:[%s0 + $0x10] sm:$0xf]
    %v74 = vld [vmem:[%s0 + $0x14] sm:$0xf]
    %v75 = vld [vmem:[%s0 + $0x18] sm:$0xf]
    %v76 = vld [vmem:[%s0 + $0x1c] sm:$0xf]
    %v77 = vld [vmem:[%s0 + $0x20] sm:$0xf]
    %v78 = vld [vmem:[%s0 + $0x24] sm:$0xf]
    %v79 = vld [vmem:[%s0 + $0x28] sm:$0xf]
    %v80 = vld [vmem:[%s0 + $0x2c] sm:$0xf]
    %v81 = vld [vmem:[%s0 + $0x30] sm:$0xf]
    %v82 = vld [vmem:[%s0 + $0x34] sm:$0xf]
    %v83 = vld [vmem:[%s0 + $0x38] sm:$0xf]
    %v84 = vld [vmem:[%s0 + $0x3c] sm:$0xf]
    %v85 = vld [vmem:[#allocation2] sm:$0xff]
    %v86 = vld [vmem:[#allocation2 + $0x8] sm:$0xff]
    %v87 = vld [vmem:[#allocation2 + $0x10] sm:$0xff]
    %v88 = vld [vmem:[#allocation2 + $0x18] sm:$0xff]
    %v89 = vld [vmem:[#allocation2 + $0x20] sm:$0xff]
    %v90 = vld [vmem:[#allocation2 + $0x28] sm:$0xff]
    %v91 = vld [vmem:[#allocation2 + $0x30] sm:$0xff]
    %v92 = vld [vmem:[#allocation2 + $0x38] sm:$0xff]
    %v93 = vld [vmem:[#allocation2 + $0x40] sm:$0xff]
    %v94 = vld [vmem:[#allocation2 + $0x48] sm:$0xff]
    %v95 = vld [vmem:[#allocation2 + $0x50] sm:$0xff]
    %v96 = vld [vmem:[#allocation2 + $0x58] sm:$0xff]
    %v97 = vld [vmem:[#allocation2 + $0x60] sm:$0xff]
    %v98 = vld [vmem:[#allocation2 + $0x68] sm:$0xff]
    %v99 = vld [vmem:[#allocation2 + $0x70] sm:$0xff]
    %v100 = vld [vmem:[#allocation2 + $0x78] sm:$0xff]
    %v101 = vld [vmem:[%s2] sm:$0x3]
    %v103 = vlaneseq
    %v104 = vshrl.u32 %v103, 7
    %v105 = vsub.s32 0, %v104
    %v106 = vrot.slane %v101, %v105
    %v107 = vlaneseq
    %v108 = vshrl.u32 %v107, 7
    %v109 = vsub.s32 1, %v108
    %v110 = vrot.slane %v101, %v109
    %v129 = vunpack.c.l.b16 %v69
    %v130 = vunpack.c.l.b16 %v70
    %v131 = vunpack.c.l.b16 %v71
    %v132 = vunpack.c.l.b16 %v72
    %v133 = vunpack.c.l.b16 %v73
    %v134 = vunpack.c.l.b16 %v74
    %v135 = vunpack.c.l.b16 %v75
    %v136 = vunpack.c.l.b16 %v76
    %v137 = vunpack.c.l.b16 %v77
    %v138 = vunpack.c.l.b16 %v78
    %v139 = vunpack.c.l.b16 %v79
    %v140 = vunpack.c.l.b16 %v80
    %v141 = vunpack.c.l.b16 %v81
    %v142 = vunpack.c.l.b16 %v82
    %v143 = vunpack.c.l.b16 %v83
    %v144 = vunpack.c.l.b16 %v84
    %v145 = vpack.c.b16 %v130, %v129
    %v146 = vpack.c.b16 %v132, %v131
    %v147 = vpack.c.b16 %v134, %v133
    %v148 = vpack.c.b16 %v136, %v135
    %v149 = vpack.c.b16 %v138, %v137
    %v150 = vpack.c.b16 %v140, %v139
    %v151 = vpack.c.b16 %v142, %v141
    %v152 = vpack.c.b16 %v144, %v143
    %v177 = vunpack.c.l.b16 %v85
    %v178 = vunpack.c.h.b16 %v85
    %v179 = vunpack.c.l.b16 %v86
    %v180 = vunpack.c.h.b16 %v86
    %v181 = vunpack.c.l.b16 %v87
    %v182 = vunpack.c.h.b16 %v87
    %v183 = vunpack.c.l.b16 %v88
    %v184 = vunpack.c.h.b16 %v88
    %v185 = vunpack.c.l.b16 %v89
    %v186 = vunpack.c.h.b16 %v89
    %v187 = vunpack.c.l.b16 %v90
    %v188 = vunpack.c.h.b16 %v90
    %v189 = vunpack.c.l.b16 %v91
    %v190 = vunpack.c.h.b16 %v91
    %v191 = vunpack.c.l.b16 %v92
    %v192 = vunpack.c.h.b16 %v92
    %v193 = vunpack.c.l.b16 %v93
    %v194 = vunpack.c.h.b16 %v93
    %v195 = vunpack.c.l.b16 %v94
    %v196 = vunpack.c.h.b16 %v94
    %v197 = vunpack.c.l.b16 %v95
    %v198 = vunpack.c.h.b16 %v95
    %v199 = vunpack.c.l.b16 %v96
    %v200 = vunpack.c.h.b16 %v96
    %v201 = vunpack.c.l.b16 %v97
    %v202 = vunpack.c.h.b16 %v97
    %v203 = vunpack.c.l.b16 %v98
    %v204 = vunpack.c.h.b16 %v98
    %v205 = vunpack.c.l.b16 %v99
    %v206 = vunpack.c.h.b16 %v99
    %v207 = vunpack.c.l.b16 %v100
    %v208 = vunpack.c.h.b16 %v100
    %v209 = vpack.c.b16 %v179, %v177
    %v210 = vpack.c.b16 %v180, %v178
    %v211 = vpack.c.b16 %v183, %v181
    %v212 = vpack.c.b16 %v184, %v182
    %v213 = vpack.c.b16 %v187, %v185
    %v214 = vpack.c.b16 %v188, %v186
    %v215 = vpack.c.b16 %v191, %v189
    %v216 = vpack.c.b16 %v192, %v190
    %v217 = vpack.c.b16 %v195, %v193
    %v218 = vpack.c.b16 %v196, %v194
    %v219 = vpack.c.b16 %v199, %v197
    %v220 = vpack.c.b16 %v200, %v198
    %v221 = vpack.c.b16 %v203, %v201
    %v222 = vpack.c.b16 %v204, %v202
    %v223 = vpack.c.b16 %v207, %v205
    %v224 = vpack.c.b16 %v208, %v206
    %241 = vmatprep.subr.bf16.mxu0 %v224
    %242 = vmatpush1.bf16.msra.mxu0 %v223
    %243 = vmatprep.subr.bf16.mxu0 %v222
    %244 = vmatpush1.bf16.msra.mxu0 %v221
    %245 = vmatprep.subr.bf16.mxu0 %v220
    %246 = vmatpush1.bf16.msra.mxu0 %v219
    %247 = vmatprep.subr.bf16.mxu0 %v218
    %248 = vmatpush1.bf16.msra.mxu0 %v217
    %249 = vmatprep.subr.bf16.mxu0 %v216
    %250 = vmatpush1.bf16.msra.mxu0 %v215
    %251 = vmatprep.subr.bf16.mxu0 %v214
    %252 = vmatpush1.bf16.msra.mxu0 %v213
    %253 = vmatprep.subr.bf16.mxu0 %v212
    %254 = vmatpush1.bf16.msra.mxu0 %v211
    %255 = vmatprep.subr.bf16.mxu0 %v210
    %256 = vmatpush1.bf16.msra.mxu0 %v209
    %257 = vmatprep.subr.bf16.mxu0 0
    %258 = vmatpush2.bf16.msra.mxu0 0
    %259 = vmatprep.subr.bf16.mxu0 0
    %260 = vmatpush2.bf16.msra.mxu0 0
    %261 = vmatprep.subr.bf16.mxu0 0
    %262 = vmatpush2.bf16.msra.mxu0 0
    %263 = vmatprep.subr.bf16.mxu0 0
    %264 = vmatpush2.bf16.msra.mxu0 0
    %265 = vmatprep.subr.bf16.mxu0 0
    %266 = vmatpush2.bf16.msra.mxu0 0
    %267 = vmatprep.subr.bf16.mxu0 0
    %268 = vmatpush2.bf16.msra.mxu0 0
    %269 = vmatprep.subr.bf16.mxu0 0
    %270 = vmatpush2.bf16.msra.mxu0 0
    %271 = vmatprep.subr.bf16.mxu0 0
    %272 = vmatpush2.bf16.msra.mxu0 0
    %273 = vmatprep.mubr.bf16.mxu0 0
    %274 = vmatmul.mubr.bf16.gmra.mxu0 %v145
    %v275 = vpop.f32.mrf.mxu0
    %v276 = vadd.f32 %v106, %v275
    %v277 = vpop.f32.mrf.mxu0
    %v278 = vadd.f32 %v110, %v277
    %v279 = vpop.f32.mrf.mxu0
    %v280 = vadd.f32 %v106, %v279
    %v281 = vpop.f32.mrf.mxu0
    %v282 = vadd.f32 %v110, %v281
    %283 = vmatprep.mubr.bf16.mxu0 0
    %284 = vmatmul.mubr.bf16.gmra.mxu0 %v146
    %v285 = vpop.f32.mrf.mxu0
    %v286 = vadd.f32 %v106, %v285
    %v287 = vpop.f32.mrf.mxu0
    %v288 = vadd.f32 %v110, %v287
    %v289 = vpop.f32.mrf.mxu0
    %v290 = vadd.f32 %v106, %v289
    %v291 = vpop.f32.mrf.mxu0
    %v292 = vadd.f32 %v110, %v291
    %293 = vmatprep.mubr.bf16.mxu0 0
    %294 = vmatmul.mubr.bf16.gmra.mxu0 %v147
    %v295 = vpop.f32.mrf.mxu0
    %v296 = vadd.f32 %v106, %v295
    %v297 = vpop.f32.mrf.mxu0
    %v298 = vadd.f32 %v110, %v297
    %v299 = vpop.f32.mrf.mxu0
    %v300 = vadd.f32 %v106, %v299
    %v301 = vpop.f32.mrf.mxu0
    %v302 = vadd.f32 %v110, %v301
    %303 = vmatprep.mubr.bf16.mxu0 0
    %304 = vmatmul.mubr.bf16.gmra.mxu0 %v148
    %v305 = vpop.f32.mrf.mxu0
    %v306 = vadd.f32 %v106, %v305
    %v307 = vpop.f32.mrf.mxu0
    %v308 = vadd.f32 %v110, %v307
    %v309 = vpop.f32.mrf.mxu0
    %v310 = vadd.f32 %v106, %v309
    %v311 = vpop.f32.mrf.mxu0
    %v312 = vadd.f32 %v110, %v311
    %313 = vmatprep.mubr.bf16.mxu0 0
    %314 = vmatmul.mubr.bf16.gmra.mxu0 %v149
    %v315 = vpop.f32.mrf.mxu0
    %v316 = vadd.f32 %v106, %v315
    %v317 = vpop.f32.mrf.mxu0
    %v318 = vadd.f32 %v110, %v317
    %v319 = vpop.f32.mrf.mxu0
    %v320 = vadd.f32 %v106, %v319
    %v321 = vpop.f32.mrf.mxu0
    %v322 = vadd.f32 %v110, %v321
    %323 = vmatprep.mubr.bf16.mxu0 0
    %324 = vmatmul.mubr.bf16.gmra.mxu0 %v150
    %v325 = vpop.f32.mrf.mxu0
    %v326 = vadd.f32 %v106, %v325
    %v327 = vpop.f32.mrf.mxu0
    %v328 = vadd.f32 %v110, %v327
    %v329 = vpop.f32.mrf.mxu0
    %v330 = vadd.f32 %v106, %v329
    %v331 = vpop.f32.mrf.mxu0
    %v332 = vadd.f32 %v110, %v331
    %333 = vmatprep.mubr.bf16.mxu0 0
    %334 = vmatmul.mubr.bf16.gmra.mxu0 %v151
    %v335 = vpop.f32.mrf.mxu0
    %v336 = vadd.f32 %v106, %v335
    %v337 = vpop.f32.mrf.mxu0
    %v338 = vadd.f32 %v110, %v337
    %v339 = vpop.f32.mrf.mxu0
    %v340 = vadd.f32 %v106, %v339
    %v341 = vpop.f32.mrf.mxu0
    %v342 = vadd.f32 %v110, %v341
    %343 = vmatprep.mubr.bf16.mxu0 0
    %344 = vmatmul.mubr.bf16.gmra.mxu0 %v152
    %v345 = vpop.f32.mrf.mxu0
    %v346 = vadd.f32 %v106, %v345
    %v347 = vpop.f32.mrf.mxu0
    %v348 = vadd.f32 %v110, %v347
    %v349 = vpop.f32.mrf.mxu0
    %v350 = vadd.f32 %v106, %v349
    %v351 = vpop.f32.mrf.mxu0
    %v352 = vadd.f32 %v110, %v351
    %353 = vdwg.mxu0
    %v354 = vmul.f32 %v276, %v276
    %v355 = vmul.f32 %v278, %v278
    %v356 = vmul.f32 %v280, %v280
    %v357 = vmul.f32 %v282, %v282
    %v358 = vmul.f32 %v286, %v286
    %v359 = vmul.f32 %v288, %v288
    %v360 = vmul.f32 %v290, %v290
    %v361 = vmul.f32 %v292, %v292
    %v362 = vmul.f32 %v296, %v296
    %v363 = vmul.f32 %v298, %v298
    %v364 = vmul.f32 %v300, %v300
    %v365 = vmul.f32 %v302, %v302
    %v366 = vmul.f32 %v306, %v306
    %v367 = vmul.f32 %v308, %v308
    %v368 = vmul.f32 %v310, %v310
    %v369 = vmul.f32 %v312, %v312
    %v370 = vmul.f32 %v316, %v316
    %v371 = vmul.f32 %v318, %v318
    %v372 = vmul.f32 %v320, %v320
    %v373 = vmul.f32 %v322, %v322
    %v374 = vmul.f32 %v326, %v326
    %v375 = vmul.f32 %v328, %v328
    %v376 = vmul.f32 %v330, %v330
    %v377 = vmul.f32 %v332, %v332
    %v378 = vmul.f32 %v336, %v336
    %v379 = vmul.f32 %v338, %v338
    %v380 = vmul.f32 %v340, %v340
    %v381 = vmul.f32 %v342, %v342
    %v382 = vmul.f32 %v346, %v346
    %v383 = vmul.f32 %v348, %v348
    %v384 = vmul.f32 %v350, %v350
    %v385 = vmul.f32 %v352, %v352
    %v386 = vmul.f32 %v276, %v354
    %v387 = vmul.f32 %v278, %v355
    %v388 = vmul.f32 %v280, %v356
    %v389 = vmul.f32 %v282, %v357
    %v390 = vmul.f32 %v286, %v358
    %v391 = vmul.f32 %v288, %v359
    %v392 = vmul.f32 %v290, %v360
    %v393 = vmul.f32 %v292, %v361
    %v394 = vmul.f32 %v296, %v362
    %v395 = vmul.f32 %v298, %v363
    %v396 = vmul.f32 %v300, %v364
    %v397 = vmul.f32 %v302, %v365
    %v398 = vmul.f32 %v306, %v366
    %v399 = vmul.f32 %v308, %v367
    %v400 = vmul.f32 %v310, %v368
    %v401 = vmul.f32 %v312, %v369
    %v402 = vmul.f32 %v316, %v370
    %v403 = vmul.f32 %v318, %v371
    %v404 = vmul.f32 %v320, %v372
    %v405 = vmul.f32 %v322, %v373
    %v406 = vmul.f32 %v326, %v374
    %v407 = vmul.f32 %v328, %v375
    %v408 = vmul.f32 %v330, %v376
    %v409 = vmul.f32 %v332, %v377
    %v410 = vmul.f32 %v336, %v378
    %v411 = vmul.f32 %v338, %v379
    %v412 = vmul.f32 %v340, %v380
    %v413 = vmul.f32 %v342, %v381
    %v414 = vmul.f32 %v346, %v382
    %v415 = vmul.f32 %v348, %v383
    %v416 = vmul.f32 %v350, %v384
    %v417 = vmul.f32 %v352, %v385
    %v418 = vmul.f32 %v386, 0.044715
    %v419 = vmul.f32 %v387, 0.044715
    %v420 = vmul.f32 %v388, 0.044715
    %v421 = vmul.f32 %v389, 0.044715
    %v422 = vmul.f32 %v390, 0.044715
    %v423 = vmul.f32 %v391, 0.044715
    %v424 = vmul.f32 %v392, 0.044715
    %v425 = vmul.f32 %v393, 0.044715
    %v426 = vmul.f32 %v394, 0.044715
    %v427 = vmul.f32 %v395, 0.044715
    %v428 = vmul.f32 %v396, 0.044715
    %v429 = vmul.f32 %v397, 0.044715
    %v430 = vmul.f32 %v398, 0.044715
    %v431 = vmul.f32 %v399, 0.044715
    %v432 = vmul.f32 %v400, 0.044715
    %v433 = vmul.f32 %v401, 0.044715
    %v434 = vmul.f32 %v402, 0.044715
    %v435 = vmul.f32 %v403, 0.044715
    %v436 = vmul.f32 %v404, 0.044715
    %v437 = vmul.f32 %v405, 0.044715
    %v438 = vmul.f32 %v406, 0.044715
    %v439 = vmul.f32 %v407, 0.044715
    %v440 = vmul.f32 %v408, 0.044715
    %v441 = vmul.f32 %v409, 0.044715
    %v442 = vmul.f32 %v410, 0.044715
    %v443 = vmul.f32 %v411, 0.044715
    %v444 = vmul.f32 %v412, 0.044715
    %v445 = vmul.f32 %v413, 0.044715
    %v446 = vmul.f32 %v414, 0.044715
    %v447 = vmul.f32 %v415, 0.044715
    %v448 = vmul.f32 %v416, 0.044715
    %v449 = vmul.f32 %v417, 0.044715
    %v450 = vadd.f32 %v276, %v418
    %v451 = vadd.f32 %v278, %v419
    %v452 = vadd.f32 %v280, %v420
    %v453 = vadd.f32 %v282, %v421
    %v454 = vadd.f32 %v286, %v422
    %v455 = vadd.f32 %v288, %v423
    %v456 = vadd.f32 %v290, %v424
    %v457 = vadd.f32 %v292, %v425
    %v458 = vadd.f32 %v296, %v426
    %v459 = vadd.f32 %v298, %v427
    %v460 = vadd.f32 %v300, %v428
    %v461 = vadd.f32 %v302, %v429
    %v462 = vadd.f32 %v306, %v430
    %v463 = vadd.f32 %v308, %v431
    %v464 = vadd.f32 %v310, %v432
    %v465 = vadd.f32 %v312, %v433
    %v466 = vadd.f32 %v316, %v434
    %v467 = vadd.f32 %v318, %v435
    %v468 = vadd.f32 %v320, %v436
    %v469 = vadd.f32 %v322, %v437
    %v470 = vadd.f32 %v326, %v438
    %v471 = vadd.f32 %v328, %v439
    %v472 = vadd.f32 %v330, %v440
    %v473 = vadd.f32 %v332, %v441
    %v474 = vadd.f32 %v336, %v442
    %v475 = vadd.f32 %v338, %v443
    %v476 = vadd.f32 %v340, %v444
    %v477 = vadd.f32 %v342, %v445
    %v478 = vadd.f32 %v346, %v446
    %v479 = vadd.f32 %v348, %v447
    %v480 = vadd.f32 %v350, %v448
    %v481 = vadd.f32 %v352, %v449
    %v482 = vmul.f32 %v450, 0.7978846
    %v483 = vmul.f32 %v451, 0.7978846
    %v484 = vmul.f32 %v452, 0.7978846
    %v485 = vmul.f32 %v453, 0.7978846
    %v486 = vmul.f32 %v454, 0.7978846
    %v487 = vmul.f32 %v455, 0.7978846
    %v488 = vmul.f32 %v456, 0.7978846
    %v489 = vmul.f32 %v457, 0.7978846
    %v490 = vmul.f32 %v458, 0.7978846
    %v491 = vmul.f32 %v459, 0.7978846
    %v492 = vmul.f32 %v460, 0.7978846
    %v493 = vmul.f32 %v461, 0.7978846
    %v494 = vmul.f32 %v462, 0.7978846
    %v495 = vmul.f32 %v463, 0.7978846
    %v496 = vmul.f32 %v464, 0.7978846
    %v497 = vmul.f32 %v465, 0.7978846
    %v498 = vmul.f32 %v466, 0.7978846
    %v499 = vmul.f32 %v467, 0.7978846
    %v500 = vmul.f32 %v468, 0.7978846
    %v501 = vmul.f32 %v469, 0.7978846
    %v502 = vmul.f32 %v470, 0.7978846
    %v503 = vmul.f32 %v471, 0.7978846
    %v504 = vmul.f32 %v472, 0.7978846
    %v505 = vmul.f32 %v473, 0.7978846
    %v506 = vmul.f32 %v474, 0.7978846
    %v507 = vmul.f32 %v475, 0.7978846
    %v508 = vmul.f32 %v476, 0.7978846
    %v509 = vmul.f32 %v477, 0.7978846
    %v510 = vmul.f32 %v478, 0.7978846
    %v511 = vmul.f32 %v479, 0.7978846
    %v512 = vmul.f32 %v480, 0.7978846
    %v513 = vmul.f32 %v481, 0.7978846
    %v514 = vtanh.pop %v482
    %v515 = vtanh.pop %v483
    %v516 = vtanh.pop %v484
    %v517 = vtanh.pop %v485
    %v518 = vtanh.pop %v486
    %v519 = vtanh.pop %v487
    %v520 = vtanh.pop %v488
    %v521 = vtanh.pop %v489
    %v522 = vtanh.pop %v490
    %v523 = vtanh.pop %v491
    %v524 = vtanh.pop %v492
    %v525 = vtanh.pop %v493
    %v526 = vtanh.pop %v494
    %v527 = vtanh.pop %v495
    %v528 = vtanh.pop %v496
    %v529 = vtanh.pop %v497
    %v530 = vtanh.pop %v498
    %v531 = vtanh.pop %v499
    %v532 = vtanh.pop %v500
    %v533 = vtanh.pop %v501
    %v534 = vtanh.pop %v502
    %v535 = vtanh.pop %v503
    %v536 = vtanh.pop %v504
    %v537 = vtanh.pop %v505
    %v538 = vtanh.pop %v506
    %v539 = vtanh.pop %v507
    %v540 = vtanh.pop %v508
    %v541 = vtanh.pop %v509
    %v542 = vtanh.pop %v510
    %v543 = vtanh.pop %v511
    %v544 = vtanh.pop %v512
    %v545 = vtanh.pop %v513
    %v546 = vadd.f32 %v514, 1.0
    %v547 = vadd.f32 %v515, 1.0
    %v548 = vadd.f32 %v516, 1.0
    %v549 = vadd.f32 %v517, 1.0
    %v550 = vadd.f32 %v518, 1.0
    %v551 = vadd.f32 %v519, 1.0
    %v552 = vadd.f32 %v520, 1.0
    %v553 = vadd.f32 %v521, 1.0
    %v554 = vadd.f32 %v522, 1.0
    %v555 = vadd.f32 %v523, 1.0
    %v556 = vadd.f32 %v524, 1.0
    %v557 = vadd.f32 %v525, 1.0
    %v558 = vadd.f32 %v526, 1.0
    %v559 = vadd.f32 %v527, 1.0
    %v560 = vadd.f32 %v528, 1.0
    %v561 = vadd.f32 %v529, 1.0
    %v562 = vadd.f32 %v530, 1.0
    %v563 = vadd.f32 %v531, 1.0
    %v564 = vadd.f32 %v532, 1.0
    %v565 = vadd.f32 %v533, 1.0
    %v566 = vadd.f32 %v534, 1.0
    %v567 = vadd.f32 %v535, 1.0
    %v568 = vadd.f32 %v536, 1.0
    %v569 = vadd.f32 %v537, 1.0
    %v570 = vadd.f32 %v538, 1.0
    %v571 = vadd.f32 %v539, 1.0
    %v572 = vadd.f32 %v540, 1.0
    %v573 = vadd.f32 %v541, 1.0
    %v574 = vadd.f32 %v542, 1.0
    %v575 = vadd.f32 %v543, 1.0
    %v576 = vadd.f32 %v544, 1.0
    %v577 = vadd.f32 %v545, 1.0
    %v578 = vmul.f32 %v546, 0.5
    %v579 = vmul.f32 %v547, 0.5
    %v580 = vmul.f32 %v548, 0.5
    %v581 = vmul.f32 %v549, 0.5
    %v582 = vmul.f32 %v550, 0.5
    %v583 = vmul.f32 %v551, 0.5
    %v584 = vmul.f32 %v552, 0.5
    %v585 = vmul.f32 %v553, 0.5
    %v586 = vmul.f32 %v554, 0.5
    %v587 = vmul.f32 %v555, 0.5
    %v588 = vmul.f32 %v556, 0.5
    %v589 = vmul.f32 %v557, 0.5
    %v590 = vmul.f32 %v558, 0.5
    %v591 = vmul.f32 %v559, 0.5
    %v592 = vmul.f32 %v560, 0.5
    %v593 = vmul.f32 %v561, 0.5
    %v594 = vmul.f32 %v562, 0.5
    %v595 = vmul.f32 %v563, 0.5
    %v596 = vmul.f32 %v564, 0.5
    %v597 = vmul.f32 %v565, 0.5
    %v598 = vmul.f32 %v566, 0.5
    %v599 = vmul.f32 %v567, 0.5
    %v600 = vmul.f32 %v568, 0.5
    %v601 = vmul.f32 %v569, 0.5
    %v602 = vmul.f32 %v570, 0.5
    %v603 = vmul.f32 %v571, 0.5
    %v604 = vmul.f32 %v572, 0.5
    %v605 = vmul.f32 %v573, 0.5
    %v606 = vmul.f32 %v574, 0.5
    %v607 = vmul.f32 %v575, 0.5
    %v608 = vmul.f32 %v576, 0.5
    %v609 = vmul.f32 %v577, 0.5
    %v610 = vmul.f32 %v276, %v578
    %v611 = vmul.f32 %v278, %v579
    %v612 = vmul.f32 %v280, %v580
    %v613 = vmul.f32 %v282, %v581
    %v614 = vmul.f32 %v286, %v582
    %v615 = vmul.f32 %v288, %v583
    %v616 = vmul.f32 %v290, %v584
    %v617 = vmul.f32 %v292, %v585
    %v618 = vmul.f32 %v296, %v586
    %v619 = vmul.f32 %v298, %v587
    %v620 = vmul.f32 %v300, %v588
    %v621 = vmul.f32 %v302, %v589
    %v622 = vmul.f32 %v306, %v590
    %v623 = vmul.f32 %v308, %v591
    %v624 = vmul.f32 %v310, %v592
    %v625 = vmul.f32 %v312, %v593
    %v626 = vmul.f32 %v316, %v594
    %v627 = vmul.f32 %v318, %v595
    %v628 = vmul.f32 %v320, %v596
    %v629 = vmul.f32 %v322, %v597
    %v630 = vmul.f32 %v326, %v598
    %v631 = vmul.f32 %v328, %v599
    %v632 = vmul.f32 %v330, %v600
    %v633 = vmul.f32 %v332, %v601
    %v634 = vmul.f32 %v336, %v602
    %v635 = vmul.f32 %v338, %v603
    %v636 = vmul.f32 %v340, %v604
    %v637 = vmul.f32 %v342, %v605
    %v638 = vmul.f32 %v346, %v606
    %v639 = vmul.f32 %v348, %v607
    %v640 = vmul.f32 %v350, %v608
    %v641 = vmul.f32 %v352, %v609
    %v642 = vld [vmem:[%s5] sm:$0xff]
    %v643 = vld [vmem:[%s5 + $0x8] sm:$0xff]
    %v644 = vld [vmem:[%s5 + $0x10] sm:$0xff]
    %v645 = vld [vmem:[%s5 + $0x18] sm:$0xff]
    %v646 = vld [vmem:[%s5 + $0x20] sm:$0xff]
    %v647 = vld [vmem:[%s5 + $0x28] sm:$0xff]
    %v648 = vld [vmem:[%s5 + $0x30] sm:$0xff]
    %v649 = vld [vmem:[%s5 + $0x38] sm:$0xff]
    %v650 = vld [vmem:[%s5 + $0x40] sm:$0xff]
    %v651 = vld [vmem:[%s5 + $0x48] sm:$0xff]
    %v652 = vld [vmem:[%s5 + $0x50] sm:$0xff]
    %v653 = vld [vmem:[%s5 + $0x58] sm:$0xff]
    %v654 = vld [vmem:[%s5 + $0x60] sm:$0xff]
    %v655 = vld [vmem:[%s5 + $0x68] sm:$0xff]
    %v656 = vld [vmem:[%s5 + $0x70] sm:$0xff]
    %v657 = vld [vmem:[%s5 + $0x78] sm:$0xff]
    %v658 = vpack.c.bf16 %v612, %v610
    %v659 = vpack.c.bf16 %v613, %v611
    %v660 = vpack.c.bf16 %v616, %v614
    %v661 = vpack.c.bf16 %v617, %v615
    %v662 = vpack.c.bf16 %v620, %v618
    %v663 = vpack.c.bf16 %v621, %v619
    %v664 = vpack.c.bf16 %v624, %v622
    %v665 = vpack.c.bf16 %v625, %v623
    %v666 = vpack.c.bf16 %v628, %v626
    %v667 = vpack.c.bf16 %v629, %v627
    %v668 = vpack.c.bf16 %v632, %v630
    %v669 = vpack.c.bf16 %v633, %v631
    %v670 = vpack.c.bf16 %v636, %v634
    %v671 = vpack.c.bf16 %v637, %v635
    %v672 = vpack.c.bf16 %v640, %v638
    %v673 = vpack.c.bf16 %v641, %v639
    %v674 = vld [vmem:[#allocation4] sm:$0xf]
    %v675 = vld [vmem:[#allocation4 + $0x4] sm:$0xf]
    %v676 = vld [vmem:[#allocation4 + $0x8] sm:$0xf]
    %v677 = vld [vmem:[#allocation4 + $0xc] sm:$0xf]
    %v678 = vld [vmem:[#allocation4 + $0x10] sm:$0xf]
    %v679 = vld [vmem:[#allocation4 + $0x14] sm:$0xf]
    %v680 = vld [vmem:[#allocation4 + $0x18] sm:$0xf]
    %v681 = vld [vmem:[#allocation4 + $0x1c] sm:$0xf]
    %v682 = vld [vmem:[#allocation4 + $0x20] sm:$0xf]
    %v683 = vld [vmem:[#allocation4 + $0x24] sm:$0xf]
    %v684 = vld [vmem:[#allocation4 + $0x28] sm:$0xf]
    %v685 = vld [vmem:[#allocation4 + $0x2c] sm:$0xf]
    %v686 = vld [vmem:[#allocation4 + $0x30] sm:$0xf]
    %v687 = vld [vmem:[#allocation4 + $0x34] sm:$0xf]
    %v688 = vld [vmem:[#allocation4 + $0x38] sm:$0xf]
    %v689 = vld [vmem:[#allocation4 + $0x3c] sm:$0xf]
    %v690 = vld [vmem:[#allocation4 + $0x40] sm:$0xf]
    %v691 = vld [vmem:[#allocation4 + $0x44] sm:$0xf]
    %v692 = vld [vmem:[#allocation4 + $0x48] sm:$0xf]
    %v693 = vld [vmem:[#allocation4 + $0x4c] sm:$0xf]
    %v694 = vld [vmem:[#allocation4 + $0x50] sm:$0xf]
    %v695 = vld [vmem:[#allocation4 + $0x54] sm:$0xf]
    %v696 = vld [vmem:[#allocation4 + $0x58] sm:$0xf]
    %v697 = vld [vmem:[#allocation4 + $0x5c] sm:$0xf]
    %v698 = vld [vmem:[#allocation4 + $0x60] sm:$0xf]
    %v699 = vld [vmem:[#allocation4 + $0x64] sm:$0xf]
    %v700 = vld [vmem:[#allocation4 + $0x68] sm:$0xf]
    %v701 = vld [vmem:[#allocation4 + $0x6c] sm:$0xf]
    %v702 = vld [vmem:[#allocation4 + $0x70] sm:$0xf]
    %v703 = vld [vmem:[#allocation4 + $0x74] sm:$0xf]
    %v704 = vld [vmem:[#allocation4 + $0x78] sm:$0xf]
    %v705 = vld [vmem:[#allocation4 + $0x7c] sm:$0xf]
    %v738 = vunpack.c.l.b16 %v674
    %v739 = vunpack.c.l.b16 %v675
    %v740 = vunpack.c.l.b16 %v676
    %v741 = vunpack.c.l.b16 %v677
    %v742 = vunpack.c.l.b16 %v678
    %v743 = vunpack.c.l.b16 %v679
    %v744 = vunpack.c.l.b16 %v680
    %v745 = vunpack.c.l.b16 %v681
    %v746 = vunpack.c.l.b16 %v682
    %v747 = vunpack.c.l.b16 %v683
    %v748 = vunpack.c.l.b16 %v684
    %v749 = vunpack.c.l.b16 %v685
    %v750 = vunpack.c.l.b16 %v686
    %v751 = vunpack.c.l.b16 %v687
    %v752 = vunpack.c.l.b16 %v688
    %v753 = vunpack.c.l.b16 %v689
    %v754 = vunpack.c.l.b16 %v690
    %v755 = vunpack.c.l.b16 %v691
    %v756 = vunpack.c.l.b16 %v692
    %v757 = vunpack.c.l.b16 %v693
    %v758 = vunpack.c.l.b16 %v694
    %v759 = vunpack.c.l.b16 %v695
    %v760 = vunpack.c.l.b16 %v696
    %v761 = vunpack.c.l.b16 %v697
    %v762 = vunpack.c.l.b16 %v698
    %v763 = vunpack.c.l.b16 %v699
    %v764 = vunpack.c.l.b16 %v700
    %v765 = vunpack.c.l.b16 %v701
    %v766 = vunpack.c.l.b16 %v702
    %v767 = vunpack.c.l.b16 %v703
    %v768 = vunpack.c.l.b16 %v704
    %v769 = vunpack.c.l.b16 %v705
    %v770 = vpack.c.b16 %v739, %v738
    %v771 = vpack.c.b16 %v741, %v740
    %v772 = vpack.c.b16 %v743, %v742
    %v773 = vpack.c.b16 %v745, %v744
    %v774 = vpack.c.b16 %v747, %v746
    %v775 = vpack.c.b16 %v749, %v748
    %v776 = vpack.c.b16 %v751, %v750
    %v777 = vpack.c.b16 %v753, %v752
    %v778 = vpack.c.b16 %v755, %v754
    %v779 = vpack.c.b16 %v757, %v756
    %v780 = vpack.c.b16 %v759, %v758
    %v781 = vpack.c.b16 %v761, %v760
    %v782 = vpack.c.b16 %v763, %v762
    %v783 = vpack.c.b16 %v765, %v764
    %v784 = vpack.c.b16 %v767, %v766
    %v785 = vpack.c.b16 %v769, %v768
    %802 = vmatprep.subr.bf16.mxu0 0
    %803 = vmatpush1.bf16.msra.mxu0 %v777
    %804 = vmatprep.subr.bf16.mxu0 0
    %805 = vmatpush1.bf16.msra.mxu0 %v776
    %806 = vmatprep.subr.bf16.mxu0 0
    %807 = vmatpush1.bf16.msra.mxu0 %v775
    %808 = vmatprep.subr.bf16.mxu0 0
    %809 = vmatpush1.bf16.msra.mxu0 %v774
    %810 = vmatprep.subr.bf16.mxu0 0
    %811 = vmatpush1.bf16.msra.mxu0 %v773
    %812 = vmatprep.subr.bf16.mxu0 0
    %813 = vmatpush1.bf16.msra.mxu0 %v772
    %814 = vmatprep.subr.bf16.mxu0 0
    %815 = vmatpush1.bf16.msra.mxu0 %v771
    %816 = vmatprep.subr.bf16.mxu0 0
    %817 = vmatpush1.bf16.msra.mxu0 %v770
    %818 = vmatprep.subr.bf16.mxu0 0
    %819 = vmatpush2.bf16.msra.mxu0 %v785
    %820 = vmatprep.subr.bf16.mxu0 0
    %821 = vmatpush2.bf16.msra.mxu0 %v784
    %822 = vmatprep.subr.bf16.mxu0 0
    %823 = vmatpush2.bf16.msra.mxu0 %v783
    %824 = vmatprep.subr.bf16.mxu0 0
    %825 = vmatpush2.bf16.msra.mxu0 %v782
    %826 = vmatprep.subr.bf16.mxu0 0
    %827 = vmatpush2.bf16.msra.mxu0 %v781
    %828 = vmatprep.subr.bf16.mxu0 0
    %829 = vmatpush2.bf16.msra.mxu0 %v780
    %830 = vmatprep.subr.bf16.mxu0 0
    %831 = vmatpush2.bf16.msra.mxu0 %v779
    %832 = vmatprep.subr.bf16.mxu0 0
    %833 = vmatpush2.bf16.msra.mxu0 %v778
    %834 = vmatprep.mubr.bf16.mxu0 %v659
    %835 = vmatmul.mubr.bf16.gmra.mxu0 %v658
    %v836 = vpop.f32.mrf.mxu0
    %v837 = vadd.f32 0.0, %v836
    %v838 = vpop.f32.mrf.mxu0
    %v839 = vpop.f32.mrf.mxu0
    %v840 = vadd.f32 0.0, %v839
    %v841 = vpop.f32.mrf.mxu0
    %842 = vmatprep.mubr.bf16.mxu0 %v661
    %843 = vmatmul.mubr.bf16.gmra.mxu0 %v660
    %v844 = vpop.f32.mrf.mxu0
    %v845 = vadd.f32 0.0, %v844
    %v846 = vpop.f32.mrf.mxu0
    %v847 = vpop.f32.mrf.mxu0
    %v848 = vadd.f32 0.0, %v847
    %v849 = vpop.f32.mrf.mxu0
    %850 = vmatprep.mubr.bf16.mxu0 %v663
    %851 = vmatmul.mubr.bf16.gmra.mxu0 %v662
    %v852 = vpop.f32.mrf.mxu0
    %v853 = vadd.f32 0.0, %v852
    %v854 = vpop.f32.mrf.mxu0
    %v855 = vpop.f32.mrf.mxu0
    %v856 = vadd.f32 0.0, %v855
    %v857 = vpop.f32.mrf.mxu0
    %858 = vmatprep.mubr.bf16.mxu0 %v665
    %859 = vmatmul.mubr.bf16.gmra.mxu0 %v664
    %v860 = vpop.f32.mrf.mxu0
    %v861 = vadd.f32 0.0, %v860
    %v862 = vpop.f32.mrf.mxu0
    %v863 = vpop.f32.mrf.mxu0
    %v864 = vadd.f32 0.0, %v863
    %v865 = vpop.f32.mrf.mxu0
    %866 = vmatprep.mubr.bf16.mxu0 %v667
    %867 = vmatmul.mubr.bf16.gmra.mxu0 %v666
    %v868 = vpop.f32.mrf.mxu0
    %v869 = vadd.f32 0.0, %v868
    %v870 = vpop.f32.mrf.mxu0
    %v871 = vpop.f32.mrf.mxu0
    %v872 = vadd.f32 0.0, %v871
    %v873 = vpop.f32.mrf.mxu0
    %874 = vmatprep.mubr.bf16.mxu0 %v669
    %875 = vmatmul.mubr.bf16.gmra.mxu0 %v668
    %v876 = vpop.f32.mrf.mxu0
    %v877 = vadd.f32 0.0, %v876
    %v878 = vpop.f32.mrf.mxu0
    %v879 = vpop.f32.mrf.mxu0
    %v880 = vadd.f32 0.0, %v879
    %v881 = vpop.f32.mrf.mxu0
    %882 = vmatprep.mubr.bf16.mxu0 %v671
    %883 = vmatmul.mubr.bf16.gmra.mxu0 %v670
    %v884 = vpop.f32.mrf.mxu0
    %v885 = vadd.f32 0.0, %v884
    %v886 = vpop.f32.mrf.mxu0
    %v887 = vpop.f32.mrf.mxu0
    %v888 = vadd.f32 0.0, %v887
    %v889 = vpop.f32.mrf.mxu0
    %890 = vmatprep.mubr.bf16.mxu0 %v673
    %891 = vmatmul.mubr.bf16.gmra.mxu0 %v672
    %v892 = vpop.f32.mrf.mxu0
    %v893 = vadd.f32 0.0, %v892
    %v894 = vpop.f32.mrf.mxu0
    %v895 = vpop.f32.mrf.mxu0
    %v896 = vadd.f32 0.0, %v895
    %v897 = vpop.f32.mrf.mxu0
    %898 = vdwg.mxu0
    %v899 = vadd.f32 %v642, %v837
    %v900 = vadd.f32 %v643, %v840
    %v901 = vadd.f32 %v644, %v845
    %v902 = vadd.f32 %v645, %v848
    %v903 = vadd.f32 %v646, %v853
    %v904 = vadd.f32 %v647, %v856
    %v905 = vadd.f32 %v648, %v861
    %v906 = vadd.f32 %v649, %v864
    %v907 = vadd.f32 %v650, %v869
    %v908 = vadd.f32 %v651, %v872
    %v909 = vadd.f32 %v652, %v877
    %v910 = vadd.f32 %v653, %v880
    %v911 = vadd.f32 %v654, %v885
    %v912 = vadd.f32 %v655, %v888
    %v913 = vadd.f32 %v656, %v893
    %v914 = vadd.f32 %v657, %v896
    %915 = vst [vmem:[%s5] sm:$0xff] %v899
    %916 = vst [vmem:[%s5 + $0x8] sm:$0xff] %v900
    %917 = vst [vmem:[%s5 + $0x10] sm:$0xff] %v901
    %918 = vst [vmem:[%s5 + $0x18] sm:$0xff] %v902
    %919 = vst [vmem:[%s5 + $0x20] sm:$0xff] %v903
    %920 = vst [vmem:[%s5 + $0x28] sm:$0xff] %v904
    %921 = vst [vmem:[%s5 + $0x30] sm:$0xff] %v905
    %922 = vst [vmem:[%s5 + $0x38] sm:$0xff] %v906
    %923 = vst [vmem:[%s5 + $0x40] sm:$0xff] %v907
    %924 = vst [vmem:[%s5 + $0x48] sm:$0xff] %v908
    %925 = vst [vmem:[%s5 + $0x50] sm:$0xff] %v909
    %926 = vst [vmem:[%s5 + $0x58] sm:$0xff] %v910
    %927 = vst [vmem:[%s5 + $0x60] sm:$0xff] %v911
    %928 = vst [vmem:[%s5 + $0x68] sm:$0xff] %v912
    %929 = vst [vmem:[%s5 + $0x70] sm:$0xff] %v913
    %930 = vst [vmem:[%s5 + $0x78] sm:$0xff] %v914
    // Predicated region
    $region34: #{_feed_forward_impl.1} parent=1 // pred_check
      %p931 = pneg %p49
    $region35: #{_feed_forward_impl.1} parent=1 // pred_check_branch
      %933 = sbr.rel (%p931) target = $region37
    $region36: #{_feed_forward_impl.1} parent=1 // pred_region
      %v934 = vld [vmem:[%s5] sm:$0xff]
      %v935 = vld [vmem:[%s5 + $0x8] sm:$0xff]
      %v936 = vld [vmem:[%s5 + $0x10] sm:$0xff]
      %v937 = vld [vmem:[%s5 + $0x18] sm:$0xff]
      %v938 = vld [vmem:[%s5 + $0x20] sm:$0xff]
      %v939 = vld [vmem:[%s5 + $0x28] sm:$0xff]
      %v940 = vld [vmem:[%s5 + $0x30] sm:$0xff]
      %v941 = vld [vmem:[%s5 + $0x38] sm:$0xff]
      %v942 = vld [vmem:[%s5 + $0x40] sm:$0xff]
      %v943 = vld [vmem:[%s5 + $0x48] sm:$0xff]
      %v944 = vld [vmem:[%s5 + $0x50] sm:$0xff]
      %v945 = vld [vmem:[%s5 + $0x58] sm:$0xff]
      %v946 = vld [vmem:[%s5 + $0x60] sm:$0xff]
      %v947 = vld [vmem:[%s5 + $0x68] sm:$0xff]
      %v948 = vld [vmem:[%s5 + $0x70] sm:$0xff]
      %v949 = vld [vmem:[%s5 + $0x78] sm:$0xff]
      %v950 = vld [vmem:[%s4] sm:$0x1]
      %v952 = vlaneseq
      %v953 = vshrl.u32 %v952, 7
      %v954 = vsub.s32 0, %v953
      %v955 = vrot.slane %v950, %v954
      %v957 = vadd.f32 %v934, %v955
      %v958 = vadd.f32 %v935, %v955
      %v959 = vadd.f32 %v936, %v955
      %v960 = vadd.f32 %v937, %v955
      %v961 = vadd.f32 %v938, %v955
      %v962 = vadd.f32 %v939, %v955
      %v963 = vadd.f32 %v940, %v955
      %v964 = vadd.f32 %v941, %v955
      %v965 = vadd.f32 %v942, %v955
      %v966 = vadd.f32 %v943, %v955
      %v967 = vadd.f32 %v944, %v955
      %v968 = vadd.f32 %v945, %v955
      %v969 = vadd.f32 %v946, %v955
      %v970 = vadd.f32 %v947, %v955
      %v971 = vadd.f32 %v948, %v955
      %v972 = vadd.f32 %v949, %v955
      %973 = vst [vmem:[%s5] sm:$0xff] %v957
      %974 = vst [vmem:[%s5 + $0x8] sm:$0xff] %v958
      %975 = vst [vmem:[%s5 + $0x10] sm:$0xff] %v959
      %976 = vst [vmem:[%s5 + $0x18] sm:$0xff] %v960
      %977 = vst [vmem:[%s5 + $0x20] sm:$0xff] %v961
      %978 = vst [vmem:[%s5 + $0x28] sm:$0xff] %v962
      %979 = vst [vmem:[%s5 + $0x30] sm:$0xff] %v963
      %980 = vst [vmem:[%s5 + $0x38] sm:$0xff] %v964
      %981 = vst [vmem:[%s5 + $0x40] sm:$0xff] %v965
      %982 = vst [vmem:[%s5 + $0x48] sm:$0xff] %v966
      %983 = vst [vmem:[%s5 + $0x50] sm:$0xff] %v967
      %984 = vst [vmem:[%s5 + $0x58] sm:$0xff] %v968
      %985 = vst [vmem:[%s5 + $0x60] sm:$0xff] %v969
      %986 = vst [vmem:[%s5 + $0x68] sm:$0xff] %v970
      %987 = vst [vmem:[%s5 + $0x70] sm:$0xff] %v971
      %988 = vst [vmem:[%s5 + $0x78] sm:$0xff] %v972
    $region37: #{_feed_forward_impl.1} parent=1 // pred_fallthru
      _
    // Predicated region
    $region38: #{_feed_forward_impl.1} parent=1 // pred_check
      _
    $region39: #{_feed_forward_impl.1} parent=1 // pred_check_branch
      %990 = sbr.rel (0) target = $region41
    $region40: #{_feed_forward_impl.1} parent=1 // pred_region
      _
    $region41: #{_feed_forward_impl.1} parent=1 // pred_fallthru
      _
    // Predicated region
    $region42: #{_feed_forward_impl.1} parent=1 // pred_check
      _
    $region43: #{_feed_forward_impl.1} parent=1 // pred_check_branch
      %992 = sbr.rel (0) target = $region45
    $region44: #{_feed_forward_impl.1} parent=1 // pred_region
      _
    $region45: #{_feed_forward_impl.1} parent=1 // pred_fallthru
      _
    %993 = vsyncpa [#allocation3], 1
    %994 = vsyncpa [#allocation5], 1

</llo_original>
